<compile_context>
chip_gen: v5e
topology: v5e:2x2
jax: 0.10.0
libtpu: 0.0.40
codegen_flags: <defaults>
</compile_context>

<pallas_src>
import functools

import jax
import jax.numpy as jnp
from jax.experimental import pallas as pl
from jax.experimental.pallas import tpu as pltpu


def _round_up(x, m):
    return ((x + m - 1) // m) * m


def _physical_vmem_bytes():
    """Per-TensorCore VMEM capacity; conservative 64 MiB (v7x) fallback."""
    try:
        info = pltpu.get_tpu_info()
        for name in ("vmem_capacity_bytes", "vmem_bytes", "vmem_size_bytes"):
            v = getattr(info, name, None)
            if v:
                return int(v)
    except Exception:
        pass
    return 64 << 20


def _tile_bytes(rows, cols, dtype):
    """VMEM footprint of a (rows, cols) tile after (sublane, 128)-lane padding."""
    isz = jnp.dtype(dtype).itemsize
    sub = max(8, 32 // isz)
    return _round_up(max(rows, 1), sub) * _round_up(max(cols, 1), 128) * isz


def prepare_params(weight, bias):
    """One-time prep of nn.Linear params (do this at parameter-init time, NOT per call):
    weight [out, in] -> W^T [in, out];  bias [out] -> [1, out]."""
    return jnp.asarray(weight).T, jnp.asarray(bias).reshape(1, -1)


def _node_update_kernel(*refs, test, concat, act):
    # One row tile per grid step; full feature dims resident in the block.
    if test:
        h_ref, norm_ref, w_ref, b_ref, o_ref = refs
    else:
        h_ref, w_ref, b_ref, o_ref = refs

    # MXU matmul with f32 accumulation on native-dtype inputs.
    y = jnp.dot(h_ref[...], w_ref[...], preferred_element_type=jnp.float32)
    if test:
        # Per-row scale commutes with the matmul: (h*n) @ W^T == n * (h @ W^T).
        y = y * norm_ref[...].astype(jnp.float32)
    y = y + b_ref[...].astype(jnp.float32)

    if concat:
        out = jnp.concatenate([y, act(y)], axis=-1)
    elif act is not None:
        out = act(y)
    else:
        out = y
    o_ref[...] = out.astype(o_ref.dtype)


def node_update(h, norm, w_t, bias2d, *, activation=jax.nn.relu,
                test=False, concat=False, tm=512):
    """Pallas NodeUpdate forward.

    h:      [N, in_feats]
    norm:   [N, 1]            (only consumed / DMA'd when test=True; may be None otherwise)
    w_t:    [in_feats, out_feats]   (pre-transposed weight from prepare_params)
    bias2d: [1, out_feats]
    """
    N, in_feats = h.shape
    in_w, out_feats = w_t.shape
    assert in_w == in_feats, (w_t.shape, h.shape)
    if concat and activation is None:
        raise ValueError("concat=True requires an activation (as in the PyTorch module).")

    out_dtype = h.dtype
    out_cols = 2 * out_feats if concat else out_feats
    isz = jnp.dtype(h.dtype).itemsize

    # Row tile: dtype-aware sublane multiple, >= 2 grid steps when N allows (v7x has
    # 2 TensorCores), shrunk until the working set fits the generation's VMEM.
    sublane = max(8, 32 // isz)
    tm = _round_up(max(sublane, min(tm, max(N, 1))), sublane)
    tm = max(sublane, min(tm, _round_up(pl.cdiv(max(N, 1), 2), sublane)))

    phys_vmem = _physical_vmem_bytes()

    def _vmem_est(rows):
        b = 2 * _tile_bytes(rows, in_feats, h.dtype)                 # h (double-buffered)
        if test:
            b += 2 * _tile_bytes(rows, 1, norm.dtype)                # norm
        b += 2 * _tile_bytes(in_feats, out_feats, w_t.dtype)        # W^T (worst case 2 bufs)
        b += 2 * _tile_bytes(1, out_feats, bias2d.dtype)            # bias
        b += 2 * _tile_bytes(rows, out_cols, out_dtype)             # output (double-buffered)
        b += 2 * _tile_bytes(rows, out_cols, jnp.float32)           # f32 intermediates
        return b

    budget = int(phys_vmem * 0.6)
    while _vmem_est(tm) > budget and tm > sublane:
        new_tm = max(sublane, _round_up(tm // 2, sublane))
        if new_tm == tm:
            break
        tm = new_tm
    # TODO(synk): if the resident W^T alone outgrows ~1/4 of VMEM (very large
    # in_feats*out_feats), add an out_feats "parallel" axis and a K "arbitrary"
    # reduction-last axis with an f32 VMEM accumulator instead of keeping W^T resident.

    grid = (pl.cdiv(N, tm),)
    vmem_limit = int(min(phys_vmem * 0.85,
                         max(32 << 20, 2 * _vmem_est(tm) + (8 << 20))))

    cost = pl.CostEstimate(
        flops=2 * N * in_feats * out_feats + N * out_cols,
        transcendentals=0,
        bytes_accessed=int(h.size * isz
                           + (norm.size * jnp.dtype(norm.dtype).itemsize if test else 0)
                           + w_t.size * jnp.dtype(w_t.dtype).itemsize
                           + bias2d.size * jnp.dtype(bias2d.dtype).itemsize
                           + N * out_cols * jnp.dtype(out_dtype).itemsize),
    )

    kernel = functools.partial(_node_update_kernel, test=test, concat=concat,
                               act=activation)

    operands = [h]
    if test:
        operands.append(norm)
    operands += [w_t, bias2d]

    def build(resident_pipeline_mode):
        extra = ({} if resident_pipeline_mode is None
                 else {"pipeline_mode": resident_pipeline_mode})
        in_specs = [pl.BlockSpec((tm, in_feats), lambda i: (i, 0))]      # h rows
        if test:
            in_specs.append(pl.BlockSpec((tm, 1), lambda i: (i, 0)))     # norm rows
        in_specs += [
            pl.BlockSpec((in_feats, out_feats), lambda i: (0, 0), **extra),  # W^T resident
            pl.BlockSpec((1, out_feats), lambda i: (0, 0), **extra),          # bias resident
        ]
        return pl.pallas_call(
            kernel,
            out_shape=jax.ShapeDtypeStruct((N, out_cols), out_dtype),
            grid=grid,
            in_specs=in_specs,
            out_specs=pl.BlockSpec((tm, out_cols), lambda i: (i, 0)),
            compiler_params=pltpu.CompilerParams(
                dimension_semantics=("parallel",),
                vmem_limit_bytes=vmem_limit,
            ),
            cost_estimate=cost,
        )

    try:
        # Grid-invariant W^T / bias: single buffer frees the largest fixed VMEM chunk.
        return build(pl.Buffered(1))(*operands)
    except Exception:
        # Fallback for JAX versions without pipeline_mode support on BlockSpec.
        return build(None)(*operands)


def _reference(h, norm, weight, bias, *, activation, test, concat):
    x = h * norm if test else h
    y = x @ weight.T + bias
    if concat:
        return jnp.concatenate([y, activation(y)], axis=1)
    if activation is not None:
        return activation(y)
    return y


if __name__ == "__main__":
    # Deliberately non-aligned small shapes to exercise ragged-tile handling.
    N, in_feats, out_feats = 30, 48, 40

    key = jax.random.PRNGKey(0)
    k_h, k_n, k_w, k_b = jax.random.split(key, 4)

    h = jax.random.normal(k_h, (N, in_feats), dtype=jnp.float32)
    norm = jax.random.uniform(k_n, (N, 1), dtype=jnp.float32, minval=0.1, maxval=1.0)

    # Deterministic nn.Linear-style init (uniform in +/- 1/sqrt(in_feats)).
    bound = 1.0 / (in_feats ** 0.5)
    weight = jax.random.uniform(k_w, (out_feats, in_feats), dtype=jnp.float32,
                                minval=-bound, maxval=bound)
    bias = jax.random.uniform(k_b, (out_feats,), dtype=jnp.float32,
                              minval=-bound, maxval=bound)

    # One-time parameter prep (transpose hoisted out of the per-call path).
    w_t, b2 = prepare_params(weight, bias)

    configs = [
        dict(test=False, concat=False, activation=jax.nn.relu),  # hidden layer
        dict(test=True,  concat=False, activation=jax.nn.relu),  # test-time norm
        dict(test=False, concat=True,  activation=jax.nn.relu),  # concat variant
        dict(test=True,  concat=True,  activation=jax.nn.relu),  # norm + concat
        dict(test=False, concat=False, activation=None),         # no activation
    ]
    for cfg in configs:
        out = jax.block_until_ready(node_update(h, norm, w_t, b2, **cfg))
        ref = _reference(h, norm, weight, bias, **cfg)
        assert out.shape == ref.shape, (out.shape, ref.shape)
        assert jnp.allclose(out, ref, atol=1e-5, rtol=1e-5), cfg

    # bf16 fast path: halves HBM traffic on the dominant streams; MXU still
    # accumulates in f32.  Compare against an f32 reference on the rounded inputs.
    h16 = h.astype(jnp.bfloat16)
    w16, b16 = prepare_params(weight.astype(jnp.bfloat16), bias.astype(jnp.bfloat16))
    out16 = jax.block_until_ready(
        node_update(h16, norm, w16, b16, activation=jax.nn.relu,
                    test=True, concat=False))
    ref16 = _reference(h16.astype(jnp.float32), norm,
                       weight.astype(jnp.bfloat16).astype(jnp.float32),
                       bias.astype(jnp.bfloat16).astype(jnp.float32),
                       activation=jax.nn.relu, test=True, concat=False)
    assert out16.shape == ref16.shape, (out16.shape, ref16.shape)
    assert jnp.allclose(out16.astype(jnp.float32), ref16, atol=3e-2, rtol=3e-2)

    print("KERNEL_OK")
</pallas_src>

<mosaic_0001>
module attributes {stable_mosaic.version = 11 : i64} {
  func.func @_node_update_kernel(%arg0: i32, %arg1: memref<16x48xf32, #tpu.memory_space<vmem>>, %arg2: memref<48x40xf32, #tpu.memory_space<vmem>>, %arg3: memref<1x40xf32, #tpu.memory_space<vmem>>, %arg4: memref<16x40xf32, #tpu.memory_space<vmem>>) attributes {dimension_semantics = [#tpu.dimension_semantics<parallel>], iteration_bounds = array<i64: 2>, scalar_prefetch = 0 : i64, scratch_operands = 0 : i64, tpu.core_type = #tpu.core_type<tc>, window_params = [{transform_indices = @transform_0, window_bounds = array<i64: 16, 48>}, {pipeline_mode = #tpu.pipeline_mode<synchronous>, transform_indices = @transform_1, window_bounds = array<i64: 48, 40>}, {pipeline_mode = #tpu.pipeline_mode<synchronous>, transform_indices = @transform_2, window_bounds = array<i64: 1, 40>}, {transform_indices = @transform_3, window_bounds = array<i64: 16, 40>}]} {
    %c0 = arith.constant 0 : index
    %c0_0 = arith.constant 0 : index
    %0 = vector.load %arg1[%c0, %c0_0] : memref<16x48xf32, #tpu.memory_space<vmem>>, vector<16x48xf32>
    %c0_1 = arith.constant 0 : index
    %c0_2 = arith.constant 0 : index
    %1 = vector.load %arg2[%c0_1, %c0_2] : memref<48x40xf32, #tpu.memory_space<vmem>>, vector<48x40xf32>
    %cst = arith.constant dense<0.000000e+00> : vector<16x40xf32>
    %2 = tpu.matmul %0, %1, %cst {dimension_numbers = #tpu.dot_dimension_numbers<[1], [0], [0], [1], [0, 0, 1, 1], [], []>} : vector<16x48xf32>, vector<48x40xf32>, vector<16x40xf32> -> vector<16x40xf32>
    %c0_3 = arith.constant 0 : index
    %c0_4 = arith.constant 0 : index
    %3 = vector.load %arg3[%c0_3, %c0_4] : memref<1x40xf32, #tpu.memory_space<vmem>>, vector<1x40xf32>
    %4 = vector.broadcast %3 : vector<1x40xf32> to vector<16x40xf32>
    %5 = arith.addf %2, %4 : vector<16x40xf32>
    %cst_5 = arith.constant 0.000000e+00 : f32
    %6 = vector.broadcast %cst_5 : f32 to vector<16x40xf32>
    %7 = arith.maximumf %5, %6 : vector<16x40xf32>
    %c0_6 = arith.constant 0 : index
    %c0_7 = arith.constant 0 : index
    %8 = vector.load %arg4[%c0_6, %c0_7] : memref<16x40xf32, #tpu.memory_space<vmem>>, vector<16x40xf32>
    tpu.vector_store %arg4[%c0_6, %c0_7], %7 {strides = array<i32>} : memref<16x40xf32, #tpu.memory_space<vmem>>, vector<16x40xf32>,
    return
  }
  func.func @transform_0(%arg0: i32) -> (i32, i32) {
    %c0_i32 = arith.constant 0 : i32
    %c0_i32_0 = arith.constant 0 : i32
    return %arg0, %c0_i32 : i32, i32
  }
  func.func @transform_1(%arg0: i32) -> (i32, i32) {
    %c0_i32 = arith.constant 0 : i32
    %c0_i32_0 = arith.constant 0 : i32
    %c0_i32_1 = arith.constant 0 : i32
    return %c0_i32, %c0_i32_0 : i32, i32
  }
  func.func @transform_2(%arg0: i32) -> (i32, i32) {
    %c0_i32 = arith.constant 0 : i32
    %c0_i32_0 = arith.constant 0 : i32
    %c0_i32_1 = arith.constant 0 : i32
    return %c0_i32, %c0_i32_0 : i32, i32
  }
  func.func @transform_3(%arg0: i32) -> (i32, i32) {
    %c0_i32 = arith.constant 0 : i32
    %c0_i32_0 = arith.constant 0 : i32
    return %arg0, %c0_i32 : i32, i32
  }
}

module attributes {stable_mosaic.version = 11 : i64} {
  func.func @_node_update_kernel(%arg0: i32, %arg1: memref<16x48xf32, #tpu.memory_space<vmem>>, %arg2: memref<48x40xf32, #tpu.memory_space<vmem>>, %arg3: memref<1x40xf32, #tpu.memory_space<vmem>>, %arg4: memref<16x40xf32, #tpu.memory_space<vmem>>) attributes {dimension_semantics = [#tpu.dimension_semantics<parallel>], iteration_bounds = array<i64: 2>, scalar_prefetch = 0 : i64, scratch_operands = 0 : i64, tpu.core_type = #tpu.core_type<tc>, window_params = [{transform_indices = @transform_0, window_bounds = array<i64: 16, 48>}, {pipeline_mode = #tpu.pipeline_mode<synchronous>, transform_indices = @transform_1, window_bounds = array<i64: 48, 40>}, {pipeline_mode = #tpu.pipeline_mode<synchronous>, transform_indices = @transform_2, window_bounds = array<i64: 1, 40>}, {transform_indices = @transform_3, window_bounds = array<i64: 16, 40>}]} {
    %c0 = arith.constant 0 : index
    %c0_0 = arith.constant 0 : index
    %0 = vector.load %arg1[%c0, %c0_0] : memref<16x48xf32, #tpu.memory_space<vmem>>, vector<16x48xf32>
    %c0_1 = arith.constant 0 : index
    %c0_2 = arith.constant 0 : index
    %1 = vector.load %arg2[%c0_1, %c0_2] : memref<48x40xf32, #tpu.memory_space<vmem>>, vector<48x40xf32>
    %cst = arith.constant dense<0.000000e+00> : vector<16x40xf32>
    %2 = tpu.matmul %0, %1, %cst {dimension_numbers = #tpu.dot_dimension_numbers<[1], [0], [0], [1], [0, 0, 1, 1], [], []>} : vector<16x48xf32>, vector<48x40xf32>, vector<16x40xf32> -> vector<16x40xf32>
    %c0_3 = arith.constant 0 : index
    %c0_4 = arith.constant 0 : index
    %3 = vector.load %arg3[%c0_3, %c0_4] : memref<1x40xf32, #tpu.memory_space<vmem>>, vector<1x40xf32>
    %4 = vector.broadcast %3 : vector<1x40xf32> to vector<16x40xf32>
    %5 = arith.addf %2, %4 : vector<16x40xf32>
    %cst_5 = arith.constant 0.000000e+00 : f32
    %6 = vector.broadcast %cst_5 : f32 to vector<16x40xf32>
    %7 = arith.maximumf %5, %6 : vector<16x40xf32>
    %c0_6 = arith.constant 0 : index
    %c0_7 = arith.constant 0 : index
    %8 = vector.load %arg4[%c0_6, %c0_7] : memref<16x40xf32, #tpu.memory_space<vmem>>, vector<16x40xf32>
    tpu.vector_store %arg4[%c0_6, %c0_7], %7 {strides = array<i32>} : memref<16x40xf32, #tpu.memory_space<vmem>>, vector<16x40xf32>,
    return
  }
  func.func @transform_0(%arg0: i32) -> (i32, i32) {
    %c0_i32 = arith.constant 0 : i32
    %c0_i32_0 = arith.constant 0 : i32
    return %arg0, %c0_i32 : i32, i32
  }
  func.func @transform_1(%arg0: i32) -> (i32, i32) {
    %c0_i32 = arith.constant 0 : i32
    %c0_i32_0 = arith.constant 0 : i32
    %c0_i32_1 = arith.constant 0 : i32
    return %c0_i32, %c0_i32_0 : i32, i32
  }
  func.func @transform_2(%arg0: i32) -> (i32, i32) {
    %c0_i32 = arith.constant 0 : i32
    %c0_i32_0 = arith.constant 0 : i32
    %c0_i32_1 = arith.constant 0 : i32
    return %c0_i32, %c0_i32_0 : i32, i32
  }
  func.func @transform_3(%arg0: i32) -> (i32, i32) {
    %c0_i32 = arith.constant 0 : i32
    %c0_i32_0 = arith.constant 0 : i32
    return %arg0, %c0_i32 : i32, i32
  }
}

</mosaic_0001>

<llo_original>
// kernel: tpu_custom_call.1
$region0: #{tpu_custom_call.1}
  #allocation0 [shape = 'u32[]', space=smem, size = 0x4, offset = 0x4, fixed_abs, tag = 'smem constant byte address 0x4 - core index']
  #allocation1 [shape = 'u32[72,128]{1,0:T(1,128)}', space=vmem, size = 0x9000, scoped, tag = 'internal scratch']
  %s0 = inlined_call_operand.vmem [shape: f32[30,48], index: 0, kind: input, shape index: {}]
  %s1 = inlined_call_operand.vmem [shape: f32[48,40], index: 1, kind: input, shape index: {}]
  %s2 = inlined_call_operand.vmem [shape: f32[1,40], index: 2, kind: input, shape index: {}]
  %s3 = inlined_call_operand.hbm [shape: f32[30,40], index: 3, kind: output, shape index: {}]
  %s4 = sld [smem:[#allocation0]]
  $region45: #{tpu_custom_call.1} parent=0
    _
  %s6 = ssub.s32 1, %s4
  %s7 = scalar_select 0, %s6, %s4
  $region1: #{tpu_custom_call.1} parent=0
    #allocation2 [shape = 'u8[16384]{0}', space=vmem, size = 0x4000, scoped, tag = 'output window, operand 0']
    #allocation3 [shape = 's32[2]{0}', space=sflag, size = 0x8, scoped, tag = 'scoped memory for tpu_custom_call.1']
    %8 = vsyncpa [#allocation3], 0
    %s9 = scalar_lea.sflag [#allocation3], 1
    %10 = vsyncpa %s9, 0
    loop: start=0, step=1, limit=4
    $region2: #{tpu_custom_call.1} parent=1 // loop_pre_header
      _
    $region3: #{tpu_custom_call.1} parent=1 // loop_header
      %s12 = sphi 0, %s16
      %p13 = scmp.ge.s32.totalorder %s12, 4
      %s22 = sphi 0, %s24
      %s25 = sphi 0, %s22
      %s26 = sphi 0, %s25
      %s42 = sphi 0, %s26
      %s46 = sphi 0, %s46
      %s48 = sphi 0, %s46
      %s49 = sphi 0, %s48
      %s63 = sphi 0, %s49
      %s67 = sphi 0, %s67
      %s69 = sphi 0, %s67
      %s70 = sphi 0, %s69
      %s84 = sphi 0, %s70
      %s90 = sphi 0, %s92
      %s93 = sphi 0, %s90
      %s94 = sphi 0, %s93
      %s110 = sphi 0, %s94
    $region4: #{tpu_custom_call.1} parent=1 // loop_header_branch
      %15 = sbr.rel (%p13) target = $region8
    $region5: #{tpu_custom_call.1} parent=1 // loop_body
      %s17 = ssub.s32 %s12, 1
      %s18 = ssub.s32 %s12, 2
      %s19 = sadd.s32 %s12, 1
      %s20 = ssub.s32 %s12, %s19
      %p21 = scmp.eq.s32.totalorder %s20, 0
      %s23 = sadd.s32 %s22, 1
      %s24 = scalar_select %p21, %s22, %s23
      %p27 = pneg %p21
      %p28 = scmp.eq.s32.totalorder %s12, 1
      %p29 = por %p27, %p28
      %p30 = scmp.ne.s32.totalorder %s22, %s25
      %p31 = scmp.eq.s32.totalorder %s12, 0
      %p32 = por %p30, %p31
      %p33 = scmp.ne.s32.totalorder %s22, %s25
      %p34 = scmp.eq.s32.totalorder %s17, 1
      %p35 = por %p33, %p34
      %p36 = scmp.ne.s32.totalorder %s25, %s26
      %p37 = scmp.eq.s32.totalorder %s17, 0
      %p38 = por %p36, %p37
      %p39 = scmp.ne.s32.totalorder %s25, %s26
      %p40 = scmp.eq.s32.totalorder %s18, 1
      %p41 = por %p39, %p40
      %p43 = scmp.ne.s32.totalorder %s26, %s42
      %p44 = scmp.eq.s32.totalorder %s18, 0
      %p45 = por %p43, %p44
      %s47 = sadd.s32 %s46, 1
      %p50 = scmp.eq.s32.totalorder %s12, 1
      %p51 = scmp.ne.s32.totalorder %s46, %s48
      %p52 = scmp.eq.s32.totalorder %s12, 0
      %p53 = por %p51, %p52
      %p54 = scmp.ne.s32.totalorder %s46, %s48
      %p55 = scmp.eq.s32.totalorder %s17, 1
      %p56 = por %p54, %p55
      %p57 = scmp.ne.s32.totalorder %s48, %s49
      %p58 = scmp.eq.s32.totalorder %s17, 0
      %p59 = por %p57, %p58
      %p60 = scmp.ne.s32.totalorder %s48, %s49
      %p61 = scmp.eq.s32.totalorder %s18, 1
      %p62 = por %p60, %p61
      %p64 = scmp.ne.s32.totalorder %s49, %s63
      %p65 = scmp.eq.s32.totalorder %s18, 0
      %p66 = por %p64, %p65
      %s68 = sadd.s32 %s67, 1
      %p71 = scmp.eq.s32.totalorder %s12, 1
      %p72 = scmp.ne.s32.totalorder %s67, %s69
      %p73 = scmp.eq.s32.totalorder %s12, 0
      %p74 = por %p72, %p73
      %p75 = scmp.ne.s32.totalorder %s67, %s69
      %p76 = scmp.eq.s32.totalorder %s17, 1
      %p77 = por %p75, %p76
      %p78 = scmp.ne.s32.totalorder %s69, %s70
      %p79 = scmp.eq.s32.totalorder %s17, 0
      %p80 = por %p78, %p79
      %p81 = scmp.ne.s32.totalorder %s69, %s70
      %p82 = scmp.eq.s32.totalorder %s18, 1
      %p83 = por %p81, %p82
      %p85 = scmp.ne.s32.totalorder %s70, %s84
      %p86 = scmp.eq.s32.totalorder %s18, 0
      %p87 = por %p85, %p86
      %s88 = ssub.s32 %s12, %s19
      %p89 = scmp.eq.s32.totalorder %s88, 0
      %s91 = sadd.s32 %s90, 1
      %s92 = scalar_select %p89, %s90, %s91
      %p95 = pneg %p89
      %p96 = scmp.eq.s32.totalorder %s12, 1
      %p97 = por %p95, %p96
      %p98 = scmp.ne.s32.totalorder %s90, %s93
      %p99 = scmp.eq.s32.totalorder %s12, 0
      %p100 = por %p98, %p99
      %p101 = scmp.ne.s32.totalorder %s90, %s93
      %p102 = scmp.eq.s32.totalorder %s17, 1
      %p103 = por %p101, %p102
      %p104 = scmp.ne.s32.totalorder %s93, %s94
      %p105 = scmp.eq.s32.totalorder %s17, 0
      %p106 = por %p104, %p105
      %p107 = scmp.ne.s32.totalorder %s93, %s94
      %p108 = scmp.eq.s32.totalorder %s18, 1
      %p109 = por %p107, %p108
      %p111 = scmp.ne.s32.totalorder %s94, %s110
      %p112 = scmp.eq.s32.totalorder %s18, 0
      %p113 = por %p111, %p112
      %p114 = scmp.le.s32.totalorder 1, %s12
      %p115 = scmp.lt.s32.totalorder %s12, 3
      %p116 = pnand %p114, %p115
      %p117 = pneg %p116
      // Predicated region
      $region9: #{tpu_custom_call.1} parent=5 // pred_check
        _
      $region10: #{tpu_custom_call.1} parent=5 // pred_check_branch
        %119 = sbr.rel (%p116) target = $region12
      $region11: #{tpu_custom_call.1} parent=5 // pred_region
        %s120 = ssub.s32 %s12, 1
        // Predicated region
        $region13: #{tpu_custom_call.1} parent=11 // pred_check
          %p121 = pneg %p59
        $region14: #{tpu_custom_call.1} parent=11 // pred_check_branch
          %123 = sbr.rel (%p121) target = $region16
        $region15: #{tpu_custom_call.1} parent=11 // pred_region
          _
        $region16: #{tpu_custom_call.1} parent=11 // pred_fallthru
          _
        // Predicated region
        $region17: #{tpu_custom_call.1} parent=11 // pred_check
          %p124 = pneg %p80
        $region18: #{tpu_custom_call.1} parent=11 // pred_check_branch
          %126 = sbr.rel (%p124) target = $region20
        $region19: #{tpu_custom_call.1} parent=11 // pred_region
          _
        $region20: #{tpu_custom_call.1} parent=11 // pred_fallthru
          _
      $region12: #{tpu_custom_call.1} parent=5 // pred_fallthru
        _
      %p127 = scmp.lt.s32.totalorder %s12, 2
      // Predicated region
      $region21: #{tpu_custom_call.1} parent=5 // pred_check
        %p128 = pneg %p127
      $region22: #{tpu_custom_call.1} parent=5 // pred_check_branch
        %130 = sbr.rel (%p128) target = $region24
      $region23: #{tpu_custom_call.1} parent=5 // pred_region
        // Predicated region
        $region25: #{tpu_custom_call.1} parent=23 // pred_check
          %p131 = pneg %p32
        $region26: #{tpu_custom_call.1} parent=23 // pred_check_branch
          %133 = sbr.rel (%p131) target = $region28
        $region27: #{tpu_custom_call.1} parent=23 // pred_region
          %s134 = smul.u32 2, %s12
          %p135 = scmp.lt.s32.totalorder %s134, 3
          %s136 = scalar_select %p135, %s134, 3
          %s137 = smul.addr %s136, 8
          %s138 = scalar_lea.vmem %s0, %s137
          %s139 = smul.u32 2, %s12
        $region28: #{tpu_custom_call.1} parent=23 // pred_fallthru
          _
      $region24: #{tpu_custom_call.1} parent=5 // pred_fallthru
        _
      %p140 = scmp.le.s32.totalorder 1, %s12
      %p141 = scmp.lt.s32.totalorder %s12, 3
      %p142 = pnand %p140, %p141
      %p143 = pneg %p142
      // Predicated region
      $region29: #{tpu_custom_call.1} parent=5 // pred_check
        _
      $region30: #{tpu_custom_call.1} parent=5 // pred_check_branch
        %145 = sbr.rel (%p142) target = $region32
      $region31: #{tpu_custom_call.1} parent=5 // pred_region
        %s146 = ssub.s32 %s12, 1
        %s147 = smul.u32 2, %s17
        %p148 = scmp.lt.s32.totalorder %s147, 3
        %s149 = scalar_select %p148, %s147, 3
        %s150 = smul.addr %s149, 8
        %s151 = scalar_lea.vmem %s0, %s150
        %p152 = pneg %p38
        %p153 = pneg %p35
        %p154 = pneg %p59
        %p155 = pneg %p56
        %p156 = pneg %p80
        %p157 = pneg %p77
        %p158 = pneg %p106
        %p159 = pneg %p103
        %s160 = sand.u32 %s93, 1
        %s161 = scalar_lea.sflag [#allocation3], %s160
        %s162 = sand.u32 %s93, 1
        %s163 = smul.addr %s162, 16
        %s164 = scalar_lea.vmem [#allocation2], %s163
        %s165 = smul.u32 2, %s17
        %p166 = scmp.lt.s32.totalorder %s165, 3
        %s167 = scalar_select %p166, %s165, 3
        %s168 = smul.addr %s167, 8
        %s169 = scalar_lea.vmem %s0, %s168
        %s170 = smul.u32 2, %s17
        %s171 = smul.u32 2, %s17
        %v172 = vld [vmem:[%s169] sm:$0xff]
        %v173 = vld [vmem:[%s169 + $0x8] sm:$0xff]
        %v174 = vld [vmem:[%s1] sm:$0xff]
        %v175 = vld [vmem:[%s1 + $0x8] sm:$0xff]
        %v176 = vld [vmem:[%s1 + $0x10] sm:$0xff]
        %v177 = vld [vmem:[%s1 + $0x18] sm:$0xff]
        %v178 = vld [vmem:[%s1 + $0x20] sm:$0xff]
        %v179 = vld [vmem:[%s1 + $0x28] sm:$0xff]
        %v180 = vld [vmem:[%s2] sm:$0x1]
        %v182 = vperm.slane %v180, 0
        %vm184 = vcmask 392192
        %v186 = vsel %vm184, %v172, 0
        %v189 = vsel %vm184, %v173, 0
        %191 = vmatpush.msra.mxu0 0.0
        %192 = vmatpush.msra.mxu0 0.0
        %193 = vmatpush.msra.mxu0 0.0
        %194 = vmatpush.msra.mxu0 0.0
        %195 = vmatpush.msra.mxu0 0.0
        %196 = vmatpush.msra.mxu0 0.0
        %197 = vmatpush.msra.mxu0 0.0
        %198 = vmatpush.msra.mxu0 0.0
        %199 = vmatpush.msra.mxu0 0.0
        %200 = vmatpush.msra.mxu0 0.0
        %201 = vmatpush.msra.mxu0 %v179
        %202 = vmatpush.msra.mxu0 %v178
        %203 = vmatpush.msra.mxu0 %v177
        %204 = vmatpush.msra.mxu0 %v176
        %205 = vmatpush.msra.mxu0 %v175
        %206 = vmatpush.msra.mxu0 %v174
        %207 = vmatmul.f32.gmra.mxu0 %v186
        %v208 = vpop.f32.mrf.mxu0
        %v209 = vadd.f32 %v182, %v208
        %210 = vmatmul.f32.gmra.mxu0 %v189
        %v211 = vpop.f32.mrf.mxu0
        %v212 = vadd.f32 %v182, %v211
        %213 = vdwg.mxu0
        %v214 = vmax.f32 %v209, 0.0
        %v215 = vmax.f32 %v212, 0.0
        %vm216 = vcmask 326656
        %217 = vst.msk [vmem:[%s164] sm:$0xff] %vm216, %v214
        %218 = vst.msk [vmem:[%s164 + $0x8] sm:$0xff] %vm216, %v215
        %s219 = sand.u32 %s93, 1
        %s220 = scalar_lea.sflag [#allocation3], %s219
        %s221 = sand.u32 %s93, 1
        %s222 = smul.addr %s221, 16
        %s223 = scalar_lea.vmem [#allocation2], %s222
        // Predicated region
        $region33: #{tpu_custom_call.1} parent=31 // pred_check
          %p224 = pneg %p103
        $region34: #{tpu_custom_call.1} parent=31 // pred_check_branch
          %226 = sbr.rel (%p224) target = $region36
        $region35: #{tpu_custom_call.1} parent=31 // pred_region
          %s227 = smul.u32 2, %s17
          %229 = vsyncadd %s220, 0
          %s230 = smul.addr %s227, 8
          %s231 = scalar_lea.hbm %s3, %s230
          %s232 = sshll.u32 %s223, 4
          %s233 = int_to_ptr.vmem [resolvable:$true] %s232
          %s234 = sshll.u32 %s231, 4
          %s235 = int_to_ptr.hbm [resolvable:$true] %s234
          %240 = dma.vmem_to_hbm [thread:$0]  %s233, 256, %s235, %s220, 128, 128, 8
        $region36: #{tpu_custom_call.1} parent=31 // pred_fallthru
          _
      $region32: #{tpu_custom_call.1} parent=5 // pred_fallthru
        _
      %p241 = scmp.le.s32.totalorder 2, %s12
      // Predicated region
      $region37: #{tpu_custom_call.1} parent=5 // pred_check
        %p242 = pneg %p241
      $region38: #{tpu_custom_call.1} parent=5 // pred_check_branch
        %244 = sbr.rel (%p242) target = $region40
      $region39: #{tpu_custom_call.1} parent=5 // pred_region
        %s245 = ssub.s32 %s12, 2
        // Predicated region
        $region41: #{tpu_custom_call.1} parent=39 // pred_check
          %p246 = pneg %p109
        $region42: #{tpu_custom_call.1} parent=39 // pred_check_branch
          %248 = sbr.rel (%p246) target = $region44
        $region43: #{tpu_custom_call.1} parent=39 // pred_region
          %s249 = sand.u32 %s94, 1
          %s250 = scalar_lea.sflag [#allocation3], %s249
          %s251 = sand.u32 %s94, 1
          %s252 = smul.addr %s251, 16
          %s253 = scalar_lea.vmem [#allocation2], %s252
          %255 = dma.done %s250, 256
        $region44: #{tpu_custom_call.1} parent=39 // pred_fallthru
          _
      $region40: #{tpu_custom_call.1} parent=5 // pred_fallthru
        _
    $region6: #{tpu_custom_call.1} parent=1 // loop_footer
      %s16 = sadd.s32 1, %s12
    $region7: #{tpu_custom_call.1} parent=1 // loop_footer_branch
      %11 = sbr.rel target = $region3
    $region8: #{tpu_custom_call.1} parent=1 // loop_exit
      _
    %256 = vsyncpa [#allocation3], 1
    %s257 = scalar_lea.sflag [#allocation3], 1
    %258 = vsyncpa %s257, 1

// kernel: tpu_custom_call.1
$region0: #{tpu_custom_call.1}
  #allocation0 [shape = 'u32[]', space=smem, size = 0x4, offset = 0x4, fixed_abs, tag = 'smem constant byte address 0x4 - core index']
  #allocation1 [shape = 'u32[72,128]{1,0:T(1,128)}', space=vmem, size = 0x9000, scoped, tag = 'internal scratch']
  %s0 = inlined_call_operand.vmem [shape: f32[30,48], index: 0, kind: input, shape index: {}]
  %s1 = inlined_call_operand.vmem [shape: f32[48,40], index: 1, kind: input, shape index: {}]
  %s2 = inlined_call_operand.vmem [shape: f32[1,40], index: 2, kind: input, shape index: {}]
  %s3 = inlined_call_operand.hbm [shape: f32[30,40], index: 3, kind: output, shape index: {}]
  %s4 = sld [smem:[#allocation0]]
  $region45: #{tpu_custom_call.1} parent=0
    _
  %s6 = ssub.s32 1, %s4
  %s7 = scalar_select 0, %s6, %s4
  $region1: #{tpu_custom_call.1} parent=0
    #allocation2 [shape = 'u8[16384]{0}', space=vmem, size = 0x4000, scoped, tag = 'output window, operand 0']
    #allocation3 [shape = 's32[2]{0}', space=sflag, size = 0x8, scoped, tag = 'scoped memory for tpu_custom_call.1']
    %8 = vsyncpa [#allocation3], 0
    %s9 = scalar_lea.sflag [#allocation3], 1
    %10 = vsyncpa %s9, 0
    loop: start=0, step=1, limit=4
    $region2: #{tpu_custom_call.1} parent=1 // loop_pre_header
      _
    $region3: #{tpu_custom_call.1} parent=1 // loop_header
      %s12 = sphi 0, %s16
      %p13 = scmp.ge.s32.totalorder %s12, 4
      %s22 = sphi 0, %s24
      %s25 = sphi 0, %s22
      %s26 = sphi 0, %s25
      %s42 = sphi 0, %s26
      %s46 = sphi 0, %s46
      %s48 = sphi 0, %s46
      %s49 = sphi 0, %s48
      %s63 = sphi 0, %s49
      %s67 = sphi 0, %s67
      %s69 = sphi 0, %s67
      %s70 = sphi 0, %s69
      %s84 = sphi 0, %s70
      %s90 = sphi 0, %s92
      %s93 = sphi 0, %s90
      %s94 = sphi 0, %s93
      %s110 = sphi 0, %s94
    $region4: #{tpu_custom_call.1} parent=1 // loop_header_branch
      %15 = sbr.rel (%p13) target = $region8
    $region5: #{tpu_custom_call.1} parent=1 // loop_body
      %s17 = ssub.s32 %s12, 1
      %s18 = ssub.s32 %s12, 2
      %s19 = sadd.s32 %s12, 1
      %s20 = ssub.s32 %s12, %s19
      %p21 = scmp.eq.s32.totalorder %s20, 0
      %s23 = sadd.s32 %s22, 1
      %s24 = scalar_select %p21, %s22, %s23
      %p27 = pneg %p21
      %p28 = scmp.eq.s32.totalorder %s12, 1
      %p29 = por %p27, %p28
      %p30 = scmp.ne.s32.totalorder %s22, %s25
      %p31 = scmp.eq.s32.totalorder %s12, 0
      %p32 = por %p30, %p31
      %p33 = scmp.ne.s32.totalorder %s22, %s25
      %p34 = scmp.eq.s32.totalorder %s17, 1
      %p35 = por %p33, %p34
      %p36 = scmp.ne.s32.totalorder %s25, %s26
      %p37 = scmp.eq.s32.totalorder %s17, 0
      %p38 = por %p36, %p37
      %p39 = scmp.ne.s32.totalorder %s25, %s26
      %p40 = scmp.eq.s32.totalorder %s18, 1
      %p41 = por %p39, %p40
      %p43 = scmp.ne.s32.totalorder %s26, %s42
      %p44 = scmp.eq.s32.totalorder %s18, 0
      %p45 = por %p43, %p44
      %s47 = sadd.s32 %s46, 1
      %p50 = scmp.eq.s32.totalorder %s12, 1
      %p51 = scmp.ne.s32.totalorder %s46, %s48
      %p52 = scmp.eq.s32.totalorder %s12, 0
      %p53 = por %p51, %p52
      %p54 = scmp.ne.s32.totalorder %s46, %s48
      %p55 = scmp.eq.s32.totalorder %s17, 1
      %p56 = por %p54, %p55
      %p57 = scmp.ne.s32.totalorder %s48, %s49
      %p58 = scmp.eq.s32.totalorder %s17, 0
      %p59 = por %p57, %p58
      %p60 = scmp.ne.s32.totalorder %s48, %s49
      %p61 = scmp.eq.s32.totalorder %s18, 1
      %p62 = por %p60, %p61
      %p64 = scmp.ne.s32.totalorder %s49, %s63
      %p65 = scmp.eq.s32.totalorder %s18, 0
      %p66 = por %p64, %p65
      %s68 = sadd.s32 %s67, 1
      %p71 = scmp.eq.s32.totalorder %s12, 1
      %p72 = scmp.ne.s32.totalorder %s67, %s69
      %p73 = scmp.eq.s32.totalorder %s12, 0
      %p74 = por %p72, %p73
      %p75 = scmp.ne.s32.totalorder %s67, %s69
      %p76 = scmp.eq.s32.totalorder %s17, 1
      %p77 = por %p75, %p76
      %p78 = scmp.ne.s32.totalorder %s69, %s70
      %p79 = scmp.eq.s32.totalorder %s17, 0
      %p80 = por %p78, %p79
      %p81 = scmp.ne.s32.totalorder %s69, %s70
      %p82 = scmp.eq.s32.totalorder %s18, 1
      %p83 = por %p81, %p82
      %p85 = scmp.ne.s32.totalorder %s70, %s84
      %p86 = scmp.eq.s32.totalorder %s18, 0
      %p87 = por %p85, %p86
      %s88 = ssub.s32 %s12, %s19
      %p89 = scmp.eq.s32.totalorder %s88, 0
      %s91 = sadd.s32 %s90, 1
      %s92 = scalar_select %p89, %s90, %s91
      %p95 = pneg %p89
      %p96 = scmp.eq.s32.totalorder %s12, 1
      %p97 = por %p95, %p96
      %p98 = scmp.ne.s32.totalorder %s90, %s93
      %p99 = scmp.eq.s32.totalorder %s12, 0
      %p100 = por %p98, %p99
      %p101 = scmp.ne.s32.totalorder %s90, %s93
      %p102 = scmp.eq.s32.totalorder %s17, 1
      %p103 = por %p101, %p102
      %p104 = scmp.ne.s32.totalorder %s93, %s94
      %p105 = scmp.eq.s32.totalorder %s17, 0
      %p106 = por %p104, %p105
      %p107 = scmp.ne.s32.totalorder %s93, %s94
      %p108 = scmp.eq.s32.totalorder %s18, 1
      %p109 = por %p107, %p108
      %p111 = scmp.ne.s32.totalorder %s94, %s110
      %p112 = scmp.eq.s32.totalorder %s18, 0
      %p113 = por %p111, %p112
      %p114 = scmp.le.s32.totalorder 1, %s12
      %p115 = scmp.lt.s32.totalorder %s12, 3
      %p116 = pnand %p114, %p115
      %p117 = pneg %p116
      // Predicated region
      $region9: #{tpu_custom_call.1} parent=5 // pred_check
        _
      $region10: #{tpu_custom_call.1} parent=5 // pred_check_branch
        %119 = sbr.rel (%p116) target = $region12
      $region11: #{tpu_custom_call.1} parent=5 // pred_region
        %s120 = ssub.s32 %s12, 1
        // Predicated region
        $region13: #{tpu_custom_call.1} parent=11 // pred_check
          %p121 = pneg %p59
        $region14: #{tpu_custom_call.1} parent=11 // pred_check_branch
          %123 = sbr.rel (%p121) target = $region16
        $region15: #{tpu_custom_call.1} parent=11 // pred_region
          _
        $region16: #{tpu_custom_call.1} parent=11 // pred_fallthru
          _
        // Predicated region
        $region17: #{tpu_custom_call.1} parent=11 // pred_check
          %p124 = pneg %p80
        $region18: #{tpu_custom_call.1} parent=11 // pred_check_branch
          %126 = sbr.rel (%p124) target = $region20
        $region19: #{tpu_custom_call.1} parent=11 // pred_region
          _
        $region20: #{tpu_custom_call.1} parent=11 // pred_fallthru
          _
      $region12: #{tpu_custom_call.1} parent=5 // pred_fallthru
        _
      %p127 = scmp.lt.s32.totalorder %s12, 2
      // Predicated region
      $region21: #{tpu_custom_call.1} parent=5 // pred_check
        %p128 = pneg %p127
      $region22: #{tpu_custom_call.1} parent=5 // pred_check_branch
        %130 = sbr.rel (%p128) target = $region24
      $region23: #{tpu_custom_call.1} parent=5 // pred_region
        // Predicated region
        $region25: #{tpu_custom_call.1} parent=23 // pred_check
          %p131 = pneg %p32
        $region26: #{tpu_custom_call.1} parent=23 // pred_check_branch
          %133 = sbr.rel (%p131) target = $region28
        $region27: #{tpu_custom_call.1} parent=23 // pred_region
          %s134 = smul.u32 2, %s12
          %p135 = scmp.lt.s32.totalorder %s134, 3
          %s136 = scalar_select %p135, %s134, 3
          %s137 = smul.addr %s136, 8
          %s138 = scalar_lea.vmem %s0, %s137
          %s139 = smul.u32 2, %s12
        $region28: #{tpu_custom_call.1} parent=23 // pred_fallthru
          _
      $region24: #{tpu_custom_call.1} parent=5 // pred_fallthru
        _
      %p140 = scmp.le.s32.totalorder 1, %s12
      %p141 = scmp.lt.s32.totalorder %s12, 3
      %p142 = pnand %p140, %p141
      %p143 = pneg %p142
      // Predicated region
      $region29: #{tpu_custom_call.1} parent=5 // pred_check
        _
      $region30: #{tpu_custom_call.1} parent=5 // pred_check_branch
        %145 = sbr.rel (%p142) target = $region32
      $region31: #{tpu_custom_call.1} parent=5 // pred_region
        %s146 = ssub.s32 %s12, 1
        %s147 = smul.u32 2, %s17
        %p148 = scmp.lt.s32.totalorder %s147, 3
        %s149 = scalar_select %p148, %s147, 3
        %s150 = smul.addr %s149, 8
        %s151 = scalar_lea.vmem %s0, %s150
        %p152 = pneg %p38
        %p153 = pneg %p35
        %p154 = pneg %p59
        %p155 = pneg %p56
        %p156 = pneg %p80
        %p157 = pneg %p77
        %p158 = pneg %p106
        %p159 = pneg %p103
        %s160 = sand.u32 %s93, 1
        %s161 = scalar_lea.sflag [#allocation3], %s160
        %s162 = sand.u32 %s93, 1
        %s163 = smul.addr %s162, 16
        %s164 = scalar_lea.vmem [#allocation2], %s163
        %s165 = smul.u32 2, %s17
        %p166 = scmp.lt.s32.totalorder %s165, 3
        %s167 = scalar_select %p166, %s165, 3
        %s168 = smul.addr %s167, 8
        %s169 = scalar_lea.vmem %s0, %s168
        %s170 = smul.u32 2, %s17
        %s171 = smul.u32 2, %s17
        %v172 = vld [vmem:[%s169] sm:$0xff]
        %v173 = vld [vmem:[%s169 + $0x8] sm:$0xff]
        %v174 = vld [vmem:[%s1] sm:$0xff]
        %v175 = vld [vmem:[%s1 + $0x8] sm:$0xff]
        %v176 = vld [vmem:[%s1 + $0x10] sm:$0xff]
        %v177 = vld [vmem:[%s1 + $0x18] sm:$0xff]
        %v178 = vld [vmem:[%s1 + $0x20] sm:$0xff]
        %v179 = vld [vmem:[%s1 + $0x28] sm:$0xff]
        %v180 = vld [vmem:[%s2] sm:$0x1]
        %v182 = vperm.slane %v180, 0
        %vm184 = vcmask 392192
        %v186 = vsel %vm184, %v172, 0
        %v189 = vsel %vm184, %v173, 0
        %191 = vmatpush.msra.mxu0 0.0
        %192 = vmatpush.msra.mxu0 0.0
        %193 = vmatpush.msra.mxu0 0.0
        %194 = vmatpush.msra.mxu0 0.0
        %195 = vmatpush.msra.mxu0 0.0
        %196 = vmatpush.msra.mxu0 0.0
        %197 = vmatpush.msra.mxu0 0.0
        %198 = vmatpush.msra.mxu0 0.0
        %199 = vmatpush.msra.mxu0 0.0
        %200 = vmatpush.msra.mxu0 0.0
        %201 = vmatpush.msra.mxu0 %v179
        %202 = vmatpush.msra.mxu0 %v178
        %203 = vmatpush.msra.mxu0 %v177
        %204 = vmatpush.msra.mxu0 %v176
        %205 = vmatpush.msra.mxu0 %v175
        %206 = vmatpush.msra.mxu0 %v174
        %207 = vmatmul.f32.gmra.mxu0 %v186
        %v208 = vpop.f32.mrf.mxu0
        %v209 = vadd.f32 %v182, %v208
        %210 = vmatmul.f32.gmra.mxu0 %v189
        %v211 = vpop.f32.mrf.mxu0
        %v212 = vadd.f32 %v182, %v211
        %213 = vdwg.mxu0
        %v214 = vmax.f32 %v209, 0.0
        %v215 = vmax.f32 %v212, 0.0
        %vm216 = vcmask 326656
        %217 = vst.msk [vmem:[%s164] sm:$0xff] %vm216, %v214
        %218 = vst.msk [vmem:[%s164 + $0x8] sm:$0xff] %vm216, %v215
        %s219 = sand.u32 %s93, 1
        %s220 = scalar_lea.sflag [#allocation3], %s219
        %s221 = sand.u32 %s93, 1
        %s222 = smul.addr %s221, 16
        %s223 = scalar_lea.vmem [#allocation2], %s222
        // Predicated region
        $region33: #{tpu_custom_call.1} parent=31 // pred_check
          %p224 = pneg %p103
        $region34: #{tpu_custom_call.1} parent=31 // pred_check_branch
          %226 = sbr.rel (%p224) target = $region36
        $region35: #{tpu_custom_call.1} parent=31 // pred_region
          %s227 = smul.u32 2, %s17
          %229 = vsyncadd %s220, 0
          %s230 = smul.addr %s227, 8
          %s231 = scalar_lea.hbm %s3, %s230
          %s232 = sshll.u32 %s223, 4
          %s233 = int_to_ptr.vmem [resolvable:$true] %s232
          %s234 = sshll.u32 %s231, 4
          %s235 = int_to_ptr.hbm [resolvable:$true] %s234
          %240 = dma.vmem_to_hbm [thread:$0]  %s233, 256, %s235, %s220, 128, 128, 8
        $region36: #{tpu_custom_call.1} parent=31 // pred_fallthru
          _
      $region32: #{tpu_custom_call.1} parent=5 // pred_fallthru
        _
      %p241 = scmp.le.s32.totalorder 2, %s12
      // Predicated region
      $region37: #{tpu_custom_call.1} parent=5 // pred_check
        %p242 = pneg %p241
      $region38: #{tpu_custom_call.1} parent=5 // pred_check_branch
        %244 = sbr.rel (%p242) target = $region40
      $region39: #{tpu_custom_call.1} parent=5 // pred_region
        %s245 = ssub.s32 %s12, 2
        // Predicated region
        $region41: #{tpu_custom_call.1} parent=39 // pred_check
          %p246 = pneg %p109
        $region42: #{tpu_custom_call.1} parent=39 // pred_check_branch
          %248 = sbr.rel (%p246) target = $region44
        $region43: #{tpu_custom_call.1} parent=39 // pred_region
          %s249 = sand.u32 %s94, 1
          %s250 = scalar_lea.sflag [#allocation3], %s249
          %s251 = sand.u32 %s94, 1
          %s252 = smul.addr %s251, 16
          %s253 = scalar_lea.vmem [#allocation2], %s252
          %255 = dma.done %s250, 256
        $region44: #{tpu_custom_call.1} parent=39 // pred_fallthru
          _
      $region40: #{tpu_custom_call.1} parent=5 // pred_fallthru
        _
    $region6: #{tpu_custom_call.1} parent=1 // loop_footer
      %s16 = sadd.s32 1, %s12
    $region7: #{tpu_custom_call.1} parent=1 // loop_footer_branch
      %11 = sbr.rel target = $region3
    $region8: #{tpu_custom_call.1} parent=1 // loop_exit
      _
    %256 = vsyncpa [#allocation3], 1
    %s257 = scalar_lea.sflag [#allocation3], 1
    %258 = vsyncpa %s257, 1

</llo_original>
